<compile_context>
chip_gen: v7x
topology: tpu7x:2x2x1
jax: 0.10.0
libtpu: 0.0.40
codegen_flags: <defaults>
</compile_context>

<pallas_src>
import functools

import jax
import jax.numpy as jnp
from jax import lax
from jax.experimental import pallas as pl
from jax.experimental.pallas import tpu as pltpu


def _attention_kernel(keys_ref, q_ref, w_ref, gamma_ref, beta_ref, out_ref, *, lane_dense):
    # One grid step = one batch block.
    # keys_ref : (nb, S, Dk)   keys for this batch block
    # q_ref    : (NQ, Dq)      learned query weight
    # w_ref    : (Dq, Dk)      'general' attention projection W
    # gamma/beta: (1, Dk)      LayerNorm params
    # out_ref  : (nb, NQ*Dk) if lane_dense else (nb, NQ, Dk)
    nb, _, dk = keys_ref.shape
    nq = q_ref.shape[0]

    keys3 = keys_ref[...]                                        # (nb, S, Dk)
    gamma = gamma_ref[...]                                       # (1, Dk)
    beta = beta_ref[...]                                         # (1, Dk)

    # Batch-invariant query projection, folded into the kernel (tiny MXU op in MXU slack,
    # avoids a separate standalone XLA dispatch per call).
    qw = jnp.dot(q_ref[...], w_ref[...], preferred_element_type=jnp.float32)   # (NQ, Dk)
    qw_b = jnp.broadcast_to(qw.astype(keys3.dtype), (nb, nq, dk))               # (nb, NQ, Dk)

    # Scores for the whole batch block: batched MXU contraction over Dk (no keys transpose).
    scores = jnp.einsum('bqd,bsd->bqs', qw_b, keys3,
                        preferred_element_type=jnp.float32)       # (nb, NQ, S)

    # Stable softmax over the sequence axis (torch dim=2), vectorized over all (b, q) rows.
    scores = scores - jnp.max(scores, axis=-1, keepdims=True)
    p = jnp.exp(scores)
    # approx reciprocal runs on the EUP slot (frees VALU); the per-row scale error cancels
    # (to O(eps)) through the LayerNorm below.
    inv = pl.reciprocal(jnp.sum(p, axis=-1, keepdims=True), approx=True)
    alpha = p * inv                                               # (nb, NQ, S)

    # m = alpha @ keys for every batch element in one batched MXU contraction; keep VPU math
    # in f32, cast alpha only at the MXU boundary.
    m = jnp.einsum('bqs,bsd->bqd', alpha.astype(keys3.dtype), keys3,
                   preferred_element_type=jnp.float32)            # (nb, NQ, Dk)

    # LayerNorm over the feature axis: ONE pass for the whole block (torch eps = 1e-5).
    mu = jnp.mean(m, axis=-1, keepdims=True)
    var = jnp.mean((m - mu) ** 2, axis=-1, keepdims=True)
    y = (m - mu) * lax.rsqrt(var + 1e-5) * gamma + beta           # (nb, NQ, Dk)

    if lane_dense:
        # Lane-dense store: (nb, NQ, Dk) -> (nb, NQ*Dk) (= 128 lanes for NQ=4, Dk=32); turns a
        # 32-lane masked partial store into a full-width unmasked vst.  The sublane->lane
        # shuffle is a few XLU ops on an otherwise idle slot.
        out_ref[...] = y.reshape(nb, nq * dk).astype(out_ref.dtype)
    else:
        out_ref[...] = y.astype(out_ref.dtype)


def attention_general(keys, queries, w, gamma, beta, *,
                      batch_block=None, keys_dtype=None, lane_dense_out=True):
    """Forward of Attention(attn_type='general', learn_query=True, normalise=True), eval mode.

    keys: (B, S, Dk); queries: nn.Linear(Dq, NQ).weight -> (NQ, Dq);
    w: nn.Linear(Dk, Dq).weight -> (Dq, Dk); gamma/beta: LayerNorm(Dk) params.
    Returns (B, NQ, Dk).
    """
    B, S, Dk = keys.shape
    NQ, Dq = queries.shape
    assert w.shape == (Dq, Dk)

    out_dtype = keys.dtype
    if keys_dtype is not None:
        # e.g. jnp.bfloat16: halves HBM key bytes (kernel is bandwidth-bound at scale).
        keys = keys.astype(keys_dtype)

    if batch_block is None:
        if B * S <= 1024:
            batch_block = B        # tiny batch: collapse to one grid step
        else:
            # ~512-1024 key rows per block: BlockSpec double-buffering overlaps the keys
            # HBM->VMEM DMA of block i+1 with compute of block i, and >=2 "parallel" blocks
            # let v7x's second TensorCore help.  8-sublane alignment for the lane-dense out.
            target = max(8, 1024 // S)
            batch_block = B
            for cand in range(min(B, target), 7, -1):
                if B % cand == 0 and cand % 8 == 0:
                    batch_block = cand
                    break
    assert B % batch_block == 0
    n_blocks = B // batch_block
    if lane_dense_out and n_blocks > 1:
        assert batch_block % 8 == 0, "lane-dense out block needs 8-sublane alignment"

    gamma2 = jnp.asarray(gamma).reshape(1, Dk)
    beta2 = jnp.asarray(beta).reshape(1, Dk)

    if lane_dense_out:
        out_shape = jax.ShapeDtypeStruct((B, NQ * Dk), out_dtype)
        out_spec = pl.BlockSpec((batch_block, NQ * Dk), lambda i: (i, 0))
    else:
        out_shape = jax.ShapeDtypeStruct((B, NQ, Dk), out_dtype)
        out_spec = pl.BlockSpec((batch_block, NQ, Dk), lambda i: (i, 0, 0))

    # VMEM budget: the keys block pads Dk -> 128 lanes in VMEM and is double-buffered; keep an
    # explicit limit sized for the tightest generation (v7x: 64 MiB physical, v5e: 16 MiB scoped
    # default) instead of relying on defaults.
    itemsize = jnp.dtype(keys.dtype).itemsize
    block_bytes = 2 * batch_block * S * 128 * itemsize + 2 * batch_block * max(NQ * Dk, 128) * 4
    vmem_limit = int(min(max(4 * block_bytes, 32 * 1024 * 1024), 100 * 1024 * 1024))

    kernel = functools.partial(_attention_kernel, lane_dense=lane_dense_out)
    out = pl.pallas_call(
        kernel,
        out_shape=out_shape,
        grid=(n_blocks,),
        in_specs=[
            pl.BlockSpec((batch_block, S, Dk), lambda i: (i, 0, 0)),   # keys (batch block)
            pl.BlockSpec((NQ, Dq), lambda i: (0, 0)),                  # query weight (shared)
            pl.BlockSpec((Dq, Dk), lambda i: (0, 0)),                  # W (shared)
            pl.BlockSpec((1, Dk), lambda i: (0, 0)),                   # LayerNorm gamma
            pl.BlockSpec((1, Dk), lambda i: (0, 0)),                   # LayerNorm beta
        ],
        out_specs=out_spec,
        compiler_params=pltpu.CompilerParams(
            dimension_semantics=("parallel",),
            vmem_limit_bytes=vmem_limit,
        ),
    )(keys, queries, w, gamma2, beta2)

    if lane_dense_out:
        out = out.reshape(B, NQ, Dk)      # free row-major reshape in the wrapper
    return out


def _xavier_normal(key, shape):
    fan_out, fan_in = shape
    std = (2.0 / (fan_in + fan_out)) ** 0.5
    return std * jax.random.normal(key, shape, dtype=jnp.float32)


def _reference(keys, queries, w, gamma, beta):
    # Pure-JAX reference mirroring the PyTorch forward (mask=None, eval mode).
    align = jnp.einsum("qd,bsd->bqs", queries @ w, keys)
    alpha = jax.nn.softmax(align, axis=2)
    m = jnp.einsum("bqs,bsd->bqd", alpha, keys)
    mu = jnp.mean(m, axis=-1, keepdims=True)
    var = jnp.mean((m - mu) ** 2, axis=-1, keepdims=True)
    return (m - mu) * jax.lax.rsqrt(var + 1e-5) * gamma + beta


if __name__ == "__main__":
    # Module config: q_dim = (NQ, Dq) = (4, 16); k_dim = (S, Dk) = (8, 32)
    B, S, Dk = 2, 8, 32
    NQ, Dq = 4, 16

    root = jax.random.PRNGKey(0)
    k_keys, k_q, k_w = jax.random.split(root, 3)

    keys = jax.random.normal(k_keys, (B, S, Dk), dtype=jnp.float32)
    queries = _xavier_normal(k_q, (NQ, Dq))          # nn.Linear(Dq, NQ).weight -> (NQ, Dq)
    w = _xavier_normal(k_w, (Dq, Dk))                # nn.Linear(Dk, Dq).weight -> (Dq, Dk)
    gamma = jnp.ones((Dk,), dtype=jnp.float32)       # LayerNorm weight
    beta = jnp.zeros((Dk,), dtype=jnp.float32)       # LayerNorm bias

    try:
        out = jax.block_until_ready(
            attention_general(keys, queries, w, gamma, beta, lane_dense_out=True))
    except Exception:
        # TODO(synk): if this Mosaic build cannot lower the (nb, NQ, Dk) -> (nb, NQ*Dk)
        # sublane->lane relayout, fall back to the guaranteed (B, NQ, Dk) store layout.
        out = jax.block_until_ready(
            attention_general(keys, queries, w, gamma, beta, lane_dense_out=False))

    ref = _reference(keys, queries, w, gamma, beta)
    assert out.shape == (B, NQ, Dk)
    # approx reciprocal's per-row scale error cancels (to O(eps)) through LayerNorm; 1e-4
    # leaves margin for MXU-vs-XLA accumulation-order differences.
    assert jnp.allclose(out, ref, atol=1e-4, rtol=1e-4)

    print("KERNEL_OK")
</pallas_src>

<mosaic_0001>
module attributes {stable_mosaic.version = 11 : i64} {
  func.func @_attention_kernel(%arg0: i32, %arg1: memref<2x8x32xf32, #tpu.memory_space<vmem>>, %arg2: memref<4x16xf32, #tpu.memory_space<vmem>>, %arg3: memref<16x32xf32, #tpu.memory_space<vmem>>, %arg4: memref<1x32xf32, #tpu.memory_space<vmem>>, %arg5: memref<1x32xf32, #tpu.memory_space<vmem>>, %arg6: memref<2x128xf32, #tpu.memory_space<vmem>>) attributes {dimension_semantics = [#tpu.dimension_semantics<parallel>], iteration_bounds = array<i64: 1>, scalar_prefetch = 0 : i64, scratch_operands = 0 : i64, tpu.core_type = #tpu.core_type<tc>, window_params = [{transform_indices = @transform_0, window_bounds = array<i64: 2, 8, 32>}, {pipeline_mode = #tpu.pipeline_mode<synchronous>, transform_indices = @transform_1, window_bounds = array<i64: 4, 16>}, {pipeline_mode = #tpu.pipeline_mode<synchronous>, transform_indices = @transform_2, window_bounds = array<i64: 16, 32>}, {pipeline_mode = #tpu.pipeline_mode<synchronous>, transform_indices = @transform_3, window_bounds = array<i64: 1, 32>}, {pipeline_mode = #tpu.pipeline_mode<synchronous>, transform_indices = @transform_4, window_bounds = array<i64: 1, 32>}, {transform_indices = @transform_5, window_bounds = array<i64: 2, 128>}]} {
    %c0 = arith.constant 0 : index
    %c0_0 = arith.constant 0 : index
    %c0_1 = arith.constant 0 : index
    %0 = vector.load %arg1[%c0, %c0_0, %c0_1] : memref<2x8x32xf32, #tpu.memory_space<vmem>>, vector<2x8x32xf32>
    %c0_2 = arith.constant 0 : index
    %c0_3 = arith.constant 0 : index
    %1 = vector.load %arg4[%c0_2, %c0_3] : memref<1x32xf32, #tpu.memory_space<vmem>>, vector<1x32xf32>
    %c0_4 = arith.constant 0 : index
    %c0_5 = arith.constant 0 : index
    %2 = vector.load %arg5[%c0_4, %c0_5] : memref<1x32xf32, #tpu.memory_space<vmem>>, vector<1x32xf32>
    %c0_6 = arith.constant 0 : index
    %c0_7 = arith.constant 0 : index
    %3 = vector.load %arg2[%c0_6, %c0_7] : memref<4x16xf32, #tpu.memory_space<vmem>>, vector<4x16xf32>
    %c0_8 = arith.constant 0 : index
    %c0_9 = arith.constant 0 : index
    %4 = vector.load %arg3[%c0_8, %c0_9] : memref<16x32xf32, #tpu.memory_space<vmem>>, vector<16x32xf32>
    %cst = arith.constant dense<0.000000e+00> : vector<4x32xf32>
    %5 = tpu.matmul %3, %4, %cst {dimension_numbers = #tpu.dot_dimension_numbers<[1], [0], [0], [1], [0, 0, 1, 1], [], []>} : vector<4x16xf32>, vector<16x32xf32>, vector<4x32xf32> -> vector<4x32xf32>
    %6 = vector.shape_cast %5 : vector<4x32xf32> to vector<1x4x32xf32>
    %7 = vector.broadcast %6 : vector<1x4x32xf32> to vector<2x4x32xf32>
    "tpu.trace_start"() <{level = 10 : i32, message = "bqd,bsd->bqs"}> : () -> ()
    %cst_10 = arith.constant dense<0.000000e+00> : vector<2x4x8xf32>
    %8 = tpu.matmul %7, %0, %cst_10 {dimension_numbers = #tpu.dot_dimension_numbers<[2], [2], [1], [1], [0, 0, 0, 1, 1, 1], [0], [0]>} : vector<2x4x32xf32>, vector<2x8x32xf32>, vector<2x4x8xf32> -> vector<2x4x8xf32>
    "tpu.trace_stop"() : () -> ()
    %cst_11 = arith.constant dense<0xFF800000> : vector<2x4xf32>
    %9 = vector.multi_reduction <maximumf>, %8, %cst_11 [2] : vector<2x4x8xf32> to vector<2x4xf32>
    %10 = vector.shape_cast %9 : vector<2x4xf32> to vector<2x4x1xf32>
    %11 = vector.broadcast %10 : vector<2x4x1xf32> to vector<2x4x8xf32>
    %12 = arith.subf %8, %11 : vector<2x4x8xf32>
    %13 = math.exp %12 : vector<2x4x8xf32>
    %cst_12 = arith.constant dense<0.000000e+00> : vector<2x4xf32>
    %14 = vector.multi_reduction <add>, %13, %cst_12 [2] : vector<2x4x8xf32> to vector<2x4xf32>
    %15 = vector.shape_cast %14 : vector<2x4xf32> to vector<2x4x1xf32>
    %16 = tpu.reciprocal %15 {approx = true} : vector<2x4x1xf32> -> vector<2x4x1xf32>
    %17 = vector.broadcast %16 : vector<2x4x1xf32> to vector<2x4x8xf32>
    %18 = arith.mulf %13, %17 : vector<2x4x8xf32>
    "tpu.trace_start"() <{level = 10 : i32, message = "bqs,bsd->bqd"}> : () -> ()
    %cst_13 = arith.constant dense<0.000000e+00> : vector<2x4x32xf32>
    %19 = tpu.matmul %18, %0, %cst_13 {dimension_numbers = #tpu.dot_dimension_numbers<[2], [1], [1], [2], [0, 0, 0, 1, 1, 2], [0], [0]>} : vector<2x4x8xf32>, vector<2x8x32xf32>, vector<2x4x32xf32> -> vector<2x4x32xf32>
    "tpu.trace_stop"() : () -> ()
    %cst_14 = arith.constant dense<0.000000e+00> : vector<2x4xf32>
    %20 = vector.multi_reduction <add>, %19, %cst_14 [2] : vector<2x4x32xf32> to vector<2x4xf32>
    %21 = vector.shape_cast %20 : vector<2x4xf32> to vector<2x4x1xf32>
    %cst_15 = arith.constant 3.200000e+01 : f32
    %22 = vector.broadcast %cst_15 : f32 to vector<2x4x1xf32>
    %23 = arith.divf %21, %22 : vector<2x4x1xf32>
    %24 = vector.broadcast %23 : vector<2x4x1xf32> to vector<2x4x32xf32>
    %25 = arith.subf %19, %24 : vector<2x4x32xf32>
    %26 = arith.mulf %25, %25 : vector<2x4x32xf32>
    %cst_16 = arith.constant dense<0.000000e+00> : vector<2x4xf32>
    %27 = vector.multi_reduction <add>, %26, %cst_16 [2] : vector<2x4x32xf32> to vector<2x4xf32>
    %28 = vector.shape_cast %27 : vector<2x4xf32> to vector<2x4x1xf32>
    %cst_17 = arith.constant 3.200000e+01 : f32
    %29 = vector.broadcast %cst_17 : f32 to vector<2x4x1xf32>
    %30 = arith.divf %28, %29 : vector<2x4x1xf32>
    %31 = vector.broadcast %23 : vector<2x4x1xf32> to vector<2x4x32xf32>
    %32 = arith.subf %19, %31 : vector<2x4x32xf32>
    %cst_18 = arith.constant 9.99999974E-6 : f32
    %33 = vector.broadcast %cst_18 : f32 to vector<2x4x1xf32>
    %34 = arith.addf %30, %33 : vector<2x4x1xf32>
    %35 = math.rsqrt %34 : vector<2x4x1xf32>
    %36 = vector.broadcast %35 : vector<2x4x1xf32> to vector<2x4x32xf32>
    %37 = arith.mulf %32, %36 : vector<2x4x32xf32>
    %38 = vector.shape_cast %1 : vector<1x32xf32> to vector<1x1x32xf32>
    %39 = vector.broadcast %38 : vector<1x1x32xf32> to vector<2x4x32xf32>
    %40 = arith.mulf %37, %39 : vector<2x4x32xf32>
    %41 = vector.shape_cast %2 : vector<1x32xf32> to vector<1x1x32xf32>
    %42 = vector.broadcast %41 : vector<1x1x32xf32> to vector<2x4x32xf32>
    %43 = arith.addf %40, %42 : vector<2x4x32xf32>
    %44 = vector.shape_cast %43 : vector<2x4x32xf32> to vector<2x128xf32>
    %c0_19 = arith.constant 0 : index
    %c0_20 = arith.constant 0 : index
    %45 = vector.load %arg6[%c0_19, %c0_20] : memref<2x128xf32, #tpu.memory_space<vmem>>, vector<2x128xf32>
    tpu.vector_store %arg6[%c0_19, %c0_20], %44 {strides = array<i32>} : memref<2x128xf32, #tpu.memory_space<vmem>>, vector<2x128xf32>,
    return
  }
  func.func @transform_0(%arg0: i32) -> (i32, i32, i32) {
    %c0_i32 = arith.constant 0 : i32
    %c0_i32_0 = arith.constant 0 : i32
    %c0_i32_1 = arith.constant 0 : i32
    return %arg0, %c0_i32, %c0_i32_0 : i32, i32, i32
  }
  func.func @transform_1(%arg0: i32) -> (i32, i32) {
    %c0_i32 = arith.constant 0 : i32
    %c0_i32_0 = arith.constant 0 : i32
    %c0_i32_1 = arith.constant 0 : i32
    return %c0_i32, %c0_i32_0 : i32, i32
  }
  func.func @transform_2(%arg0: i32) -> (i32, i32) {
    %c0_i32 = arith.constant 0 : i32
    %c0_i32_0 = arith.constant 0 : i32
    %c0_i32_1 = arith.constant 0 : i32
    return %c0_i32, %c0_i32_0 : i32, i32
  }
  func.func @transform_3(%arg0: i32) -> (i32, i32) {
    %c0_i32 = arith.constant 0 : i32
    %c0_i32_0 = arith.constant 0 : i32
    %c0_i32_1 = arith.constant 0 : i32
    return %c0_i32, %c0_i32_0 : i32, i32
  }
  func.func @transform_4(%arg0: i32) -> (i32, i32) {
    %c0_i32 = arith.constant 0 : i32
    %c0_i32_0 = arith.constant 0 : i32
    %c0_i32_1 = arith.constant 0 : i32
    return %c0_i32, %c0_i32_0 : i32, i32
  }
  func.func @transform_5(%arg0: i32) -> (i32, i32) {
    %c0_i32 = arith.constant 0 : i32
    %c0_i32_0 = arith.constant 0 : i32
    return %arg0, %c0_i32 : i32, i32
  }
}

module attributes {stable_mosaic.version = 11 : i64} {
  func.func @_attention_kernel(%arg0: i32, %arg1: memref<2x8x32xf32, #tpu.memory_space<vmem>>, %arg2: memref<4x16xf32, #tpu.memory_space<vmem>>, %arg3: memref<16x32xf32, #tpu.memory_space<vmem>>, %arg4: memref<1x32xf32, #tpu.memory_space<vmem>>, %arg5: memref<1x32xf32, #tpu.memory_space<vmem>>, %arg6: memref<2x4x32xf32, #tpu.memory_space<vmem>>) attributes {dimension_semantics = [#tpu.dimension_semantics<parallel>], iteration_bounds = array<i64: 1>, scalar_prefetch = 0 : i64, scratch_operands = 0 : i64, tpu.core_type = #tpu.core_type<tc>, window_params = [{transform_indices = @transform_0, window_bounds = array<i64: 2, 8, 32>}, {pipeline_mode = #tpu.pipeline_mode<synchronous>, transform_indices = @transform_1, window_bounds = array<i64: 4, 16>}, {pipeline_mode = #tpu.pipeline_mode<synchronous>, transform_indices = @transform_2, window_bounds = array<i64: 16, 32>}, {pipeline_mode = #tpu.pipeline_mode<synchronous>, transform_indices = @transform_3, window_bounds = array<i64: 1, 32>}, {pipeline_mode = #tpu.pipeline_mode<synchronous>, transform_indices = @transform_4, window_bounds = array<i64: 1, 32>}, {transform_indices = @transform_5, window_bounds = array<i64: 2, 4, 32>}]} {
    %c0 = arith.constant 0 : index
    %c0_0 = arith.constant 0 : index
    %c0_1 = arith.constant 0 : index
    %0 = vector.load %arg1[%c0, %c0_0, %c0_1] : memref<2x8x32xf32, #tpu.memory_space<vmem>>, vector<2x8x32xf32>
    %c0_2 = arith.constant 0 : index
    %c0_3 = arith.constant 0 : index
    %1 = vector.load %arg4[%c0_2, %c0_3] : memref<1x32xf32, #tpu.memory_space<vmem>>, vector<1x32xf32>
    %c0_4 = arith.constant 0 : index
    %c0_5 = arith.constant 0 : index
    %2 = vector.load %arg5[%c0_4, %c0_5] : memref<1x32xf32, #tpu.memory_space<vmem>>, vector<1x32xf32>
    %c0_6 = arith.constant 0 : index
    %c0_7 = arith.constant 0 : index
    %3 = vector.load %arg2[%c0_6, %c0_7] : memref<4x16xf32, #tpu.memory_space<vmem>>, vector<4x16xf32>
    %c0_8 = arith.constant 0 : index
    %c0_9 = arith.constant 0 : index
    %4 = vector.load %arg3[%c0_8, %c0_9] : memref<16x32xf32, #tpu.memory_space<vmem>>, vector<16x32xf32>
    %cst = arith.constant dense<0.000000e+00> : vector<4x32xf32>
    %5 = tpu.matmul %3, %4, %cst {dimension_numbers = #tpu.dot_dimension_numbers<[1], [0], [0], [1], [0, 0, 1, 1], [], []>} : vector<4x16xf32>, vector<16x32xf32>, vector<4x32xf32> -> vector<4x32xf32>
    %6 = vector.shape_cast %5 : vector<4x32xf32> to vector<1x4x32xf32>
    %7 = vector.broadcast %6 : vector<1x4x32xf32> to vector<2x4x32xf32>
    "tpu.trace_start"() <{level = 10 : i32, message = "bqd,bsd->bqs"}> : () -> ()
    %cst_10 = arith.constant dense<0.000000e+00> : vector<2x4x8xf32>
    %8 = tpu.matmul %7, %0, %cst_10 {dimension_numbers = #tpu.dot_dimension_numbers<[2], [2], [1], [1], [0, 0, 0, 1, 1, 1], [0], [0]>} : vector<2x4x32xf32>, vector<2x8x32xf32>, vector<2x4x8xf32> -> vector<2x4x8xf32>
    "tpu.trace_stop"() : () -> ()
    %cst_11 = arith.constant dense<0xFF800000> : vector<2x4xf32>
    %9 = vector.multi_reduction <maximumf>, %8, %cst_11 [2] : vector<2x4x8xf32> to vector<2x4xf32>
    %10 = vector.shape_cast %9 : vector<2x4xf32> to vector<2x4x1xf32>
    %11 = vector.broadcast %10 : vector<2x4x1xf32> to vector<2x4x8xf32>
    %12 = arith.subf %8, %11 : vector<2x4x8xf32>
    %13 = math.exp %12 : vector<2x4x8xf32>
    %cst_12 = arith.constant dense<0.000000e+00> : vector<2x4xf32>
    %14 = vector.multi_reduction <add>, %13, %cst_12 [2] : vector<2x4x8xf32> to vector<2x4xf32>
    %15 = vector.shape_cast %14 : vector<2x4xf32> to vector<2x4x1xf32>
    %16 = tpu.reciprocal %15 {approx = true} : vector<2x4x1xf32> -> vector<2x4x1xf32>
    %17 = vector.broadcast %16 : vector<2x4x1xf32> to vector<2x4x8xf32>
    %18 = arith.mulf %13, %17 : vector<2x4x8xf32>
    "tpu.trace_start"() <{level = 10 : i32, message = "bqs,bsd->bqd"}> : () -> ()
    %cst_13 = arith.constant dense<0.000000e+00> : vector<2x4x32xf32>
    %19 = tpu.matmul %18, %0, %cst_13 {dimension_numbers = #tpu.dot_dimension_numbers<[2], [1], [1], [2], [0, 0, 0, 1, 1, 2], [0], [0]>} : vector<2x4x8xf32>, vector<2x8x32xf32>, vector<2x4x32xf32> -> vector<2x4x32xf32>
    "tpu.trace_stop"() : () -> ()
    %cst_14 = arith.constant dense<0.000000e+00> : vector<2x4xf32>
    %20 = vector.multi_reduction <add>, %19, %cst_14 [2] : vector<2x4x32xf32> to vector<2x4xf32>
    %21 = vector.shape_cast %20 : vector<2x4xf32> to vector<2x4x1xf32>
    %cst_15 = arith.constant 3.200000e+01 : f32
    %22 = vector.broadcast %cst_15 : f32 to vector<2x4x1xf32>
    %23 = arith.divf %21, %22 : vector<2x4x1xf32>
    %24 = vector.broadcast %23 : vector<2x4x1xf32> to vector<2x4x32xf32>
    %25 = arith.subf %19, %24 : vector<2x4x32xf32>
    %26 = arith.mulf %25, %25 : vector<2x4x32xf32>
    %cst_16 = arith.constant dense<0.000000e+00> : vector<2x4xf32>
    %27 = vector.multi_reduction <add>, %26, %cst_16 [2] : vector<2x4x32xf32> to vector<2x4xf32>
    %28 = vector.shape_cast %27 : vector<2x4xf32> to vector<2x4x1xf32>
    %cst_17 = arith.constant 3.200000e+01 : f32
    %29 = vector.broadcast %cst_17 : f32 to vector<2x4x1xf32>
    %30 = arith.divf %28, %29 : vector<2x4x1xf32>
    %31 = vector.broadcast %23 : vector<2x4x1xf32> to vector<2x4x32xf32>
    %32 = arith.subf %19, %31 : vector<2x4x32xf32>
    %cst_18 = arith.constant 9.99999974E-6 : f32
    %33 = vector.broadcast %cst_18 : f32 to vector<2x4x1xf32>
    %34 = arith.addf %30, %33 : vector<2x4x1xf32>
    %35 = math.rsqrt %34 : vector<2x4x1xf32>
    %36 = vector.broadcast %35 : vector<2x4x1xf32> to vector<2x4x32xf32>
    %37 = arith.mulf %32, %36 : vector<2x4x32xf32>
    %38 = vector.shape_cast %1 : vector<1x32xf32> to vector<1x1x32xf32>
    %39 = vector.broadcast %38 : vector<1x1x32xf32> to vector<2x4x32xf32>
    %40 = arith.mulf %37, %39 : vector<2x4x32xf32>
    %41 = vector.shape_cast %2 : vector<1x32xf32> to vector<1x1x32xf32>
    %42 = vector.broadcast %41 : vector<1x1x32xf32> to vector<2x4x32xf32>
    %43 = arith.addf %40, %42 : vector<2x4x32xf32>
    %c0_19 = arith.constant 0 : index
    %c0_20 = arith.constant 0 : index
    %c0_21 = arith.constant 0 : index
    %44 = vector.load %arg6[%c0_19, %c0_20, %c0_21] : memref<2x4x32xf32, #tpu.memory_space<vmem>>, vector<2x4x32xf32>
    tpu.vector_store %arg6[%c0_19, %c0_20, %c0_21], %43 {strides = array<i32>} : memref<2x4x32xf32, #tpu.memory_space<vmem>>, vector<2x4x32xf32>,
    return
  }
  func.func @transform_0(%arg0: i32) -> (i32, i32, i32) {
    %c0_i32 = arith.constant 0 : i32
    %c0_i32_0 = arith.constant 0 : i32
    %c0_i32_1 = arith.constant 0 : i32
    return %arg0, %c0_i32, %c0_i32_0 : i32, i32, i32
  }
  func.func @transform_1(%arg0: i32) -> (i32, i32) {
    %c0_i32 = arith.constant 0 : i32
    %c0_i32_0 = arith.constant 0 : i32
    %c0_i32_1 = arith.constant 0 : i32
    return %c0_i32, %c0_i32_0 : i32, i32
  }
  func.func @transform_2(%arg0: i32) -> (i32, i32) {
    %c0_i32 = arith.constant 0 : i32
    %c0_i32_0 = arith.constant 0 : i32
    %c0_i32_1 = arith.constant 0 : i32
    return %c0_i32, %c0_i32_0 : i32, i32
  }
  func.func @transform_3(%arg0: i32) -> (i32, i32) {
    %c0_i32 = arith.constant 0 : i32
    %c0_i32_0 = arith.constant 0 : i32
    %c0_i32_1 = arith.constant 0 : i32
    return %c0_i32, %c0_i32_0 : i32, i32
  }
  func.func @transform_4(%arg0: i32) -> (i32, i32) {
    %c0_i32 = arith.constant 0 : i32
    %c0_i32_0 = arith.constant 0 : i32
    %c0_i32_1 = arith.constant 0 : i32
    return %c0_i32, %c0_i32_0 : i32, i32
  }
  func.func @transform_5(%arg0: i32) -> (i32, i32, i32) {
    %c0_i32 = arith.constant 0 : i32
    %c0_i32_0 = arith.constant 0 : i32
    %c0_i32_1 = arith.constant 0 : i32
    return %arg0, %c0_i32, %c0_i32_0 : i32, i32, i32
  }
}

</mosaic_0001>

<llo_original>
// kernel: tpu_custom_call.1
$region0: #{tpu_custom_call.1}
  #allocation0 [shape = 'u32[]', space=smem, size = 0x4, offset = 0x4, fixed_abs, tag = 'smem constant byte address 0x4 - core index']
  #allocation1 [shape = 'u32[144,128]{1,0:T(1,128)}', space=vmem, size = 0x12000, scoped, tag = 'internal scratch']
  %s0 = inlined_call_operand.hbm [shape: f32[2,8,32], index: 0, kind: input, shape index: {}]
  %s1 = inlined_call_operand.hbm [shape: f32[4,16], index: 1, kind: input, shape index: {}]
  %s2 = inlined_call_operand.hbm [shape: f32[16,32], index: 2, kind: input, shape index: {}]
  %s3 = inlined_call_operand.vmem [shape: f32[1,32], index: 3, kind: input, shape index: {}]
  %s4 = inlined_call_operand.vmem [shape: f32[1,32], index: 4, kind: input, shape index: {}]
  %s5 = inlined_call_operand.hbm [shape: f32[2,128], index: 5, kind: output, shape index: {}]
  %s6 = sld [smem:[#allocation0]]
  $region42: #{tpu_custom_call.1} parent=0
    _
  %s8 = ssub.s32 1, %s6
  %s9 = scalar_select 0, %s8, %s6
  $region1: #{tpu_custom_call.1} parent=0
    #allocation2 [shape = 'u8[8192]{0}', space=vmem, size = 0x2000, scoped, tag = 'input window, operand 0, single buffered']
    #allocation3 [shape = 's32[1]{0}', space=sflag, size = 0x4, scoped, tag = 'scoped memory for tpu_custom_call.1']
    #allocation4 [shape = 's32[1]{0}', space=sflag, size = 0x4, scoped, tag = 'scoped memory for tpu_custom_call.1']
    #allocation5 [shape = 'u8[2048]{0}', space=vmem, size = 0x800, scoped, tag = 'input window, operand 1, single buffered']
    #allocation6 [shape = 's32[1]{0}', space=sflag, size = 0x4, scoped, tag = 'scoped memory for tpu_custom_call.1']
    #allocation7 [shape = 'u8[8192]{0}', space=vmem, size = 0x2000, scoped, tag = 'input window, operand 2, single buffered']
    #allocation8 [shape = 'u8[1024]{0}', space=vmem, size = 0x400, scoped, tag = 'output window, operand 0, single buffered']
    %10 = vsyncpa [#allocation3], 0
    %11 = vsyncpa [#allocation6], 0
    %12 = vsyncpa [#allocation4], 0
    // Predicated region
    $region2: #{tpu_custom_call.1} parent=1 // pred_check
      _
    $region3: #{tpu_custom_call.1} parent=1 // pred_check_branch
      %14 = sbr.rel (0) target = $region5
    $region4: #{tpu_custom_call.1} parent=1 // pred_region
      %s16 = ssub.s32 256, 256
      %17 = vsyncadd [#allocation3], %s16
      %s18 = sshll.u32 [#allocation2], 4
      %s19 = int_to_ptr.vmem [resolvable:$true] %s18
      %24 = dma.hbm_to_vmem [thread:$0]  %s0, 256, %s19, [#allocation3], 128, 128, 8
    $region5: #{tpu_custom_call.1} parent=1 // pred_fallthru
      _
    // Predicated region
    $region6: #{tpu_custom_call.1} parent=1 // pred_check
      _
    $region7: #{tpu_custom_call.1} parent=1 // pred_check_branch
      %26 = sbr.rel (0) target = $region9
    $region8: #{tpu_custom_call.1} parent=1 // pred_region
      %s28 = ssub.s32 64, 64
      %29 = vsyncadd [#allocation6], %s28
      %s31 = sshll.u32 [#allocation5], 4
      %s32 = int_to_ptr.vmem [resolvable:$true] %s31
      %34 = dma.hbm_to_vmem [thread:$0]  %s1, 64, %s32, [#allocation6]
    $region9: #{tpu_custom_call.1} parent=1 // pred_fallthru
      _
    // Predicated region
    $region10: #{tpu_custom_call.1} parent=1 // pred_check
      _
    $region11: #{tpu_custom_call.1} parent=1 // pred_check_branch
      %36 = sbr.rel (0) target = $region13
    $region12: #{tpu_custom_call.1} parent=1 // pred_region
      %s38 = ssub.s32 256, 256
      %39 = vsyncadd [#allocation6], %s38
      %s40 = sshll.u32 [#allocation7], 4
      %s41 = int_to_ptr.vmem [resolvable:$true] %s40
      %46 = dma.hbm_to_vmem [thread:$0]  %s2, 256, %s41, [#allocation6], 128, 128, 8
    $region13: #{tpu_custom_call.1} parent=1 // pred_fallthru
      _
    // Predicated region
    $region14: #{tpu_custom_call.1} parent=1 // pred_check
      _
    $region15: #{tpu_custom_call.1} parent=1 // pred_check_branch
      %48 = sbr.rel (0) target = $region17
    $region16: #{tpu_custom_call.1} parent=1 // pred_region
      _
    $region17: #{tpu_custom_call.1} parent=1 // pred_fallthru
      _
    // Predicated region
    $region18: #{tpu_custom_call.1} parent=1 // pred_check
      _
    $region19: #{tpu_custom_call.1} parent=1 // pred_check_branch
      %50 = sbr.rel (0) target = $region21
    $region20: #{tpu_custom_call.1} parent=1 // pred_region
      _
    $region21: #{tpu_custom_call.1} parent=1 // pred_fallthru
      _
    // Predicated region
    $region22: #{tpu_custom_call.1} parent=1 // pred_check
      _
    $region23: #{tpu_custom_call.1} parent=1 // pred_check_branch
      %52 = sbr.rel (0) target = $region25
    $region24: #{tpu_custom_call.1} parent=1 // pred_region
      %53 = dma.done [#allocation3], 256
    $region25: #{tpu_custom_call.1} parent=1 // pred_fallthru
      _
    // Predicated region
    $region26: #{tpu_custom_call.1} parent=1 // pred_check
      _
    $region27: #{tpu_custom_call.1} parent=1 // pred_check_branch
      %55 = sbr.rel (0) target = $region29
    $region28: #{tpu_custom_call.1} parent=1 // pred_region
      %56 = dma.done [#allocation6], 64
    $region29: #{tpu_custom_call.1} parent=1 // pred_fallthru
      _
    // Predicated region
    $region30: #{tpu_custom_call.1} parent=1 // pred_check
      _
    $region31: #{tpu_custom_call.1} parent=1 // pred_check_branch
      %58 = sbr.rel (0) target = $region33
    $region32: #{tpu_custom_call.1} parent=1 // pred_region
      %59 = dma.done [#allocation6], 256
    $region33: #{tpu_custom_call.1} parent=1 // pred_fallthru
      _
    %v60 = vld [vmem:[#allocation2] sm:$0xff]
    %v61 = vld [vmem:[#allocation2 + $0x8] sm:$0xff]
    %v62 = vld [vmem:[%s3] sm:$0x1]
    %v63 = vld [vmem:[%s4] sm:$0x1]
    %v64 = vld [vmem:[#allocation5] sm:$0xf]
    %v65 = vld [vmem:[#allocation7] sm:$0xff]
    %v66 = vld [vmem:[#allocation7 + $0x8] sm:$0xff]
    %vm67 = vcmask 130048
    %v69 = vsel %vm67, %v64, 0
    %71 = vmatprep.subr.mxu0 0.0
    %72 = vmatpush1.msra.mxu0 %v65
    %73 = vmatprep.subr.mxu0 0.0
    %74 = vmatpush1.msra.mxu0 %v66
    %75 = vmatprep.subr.mxu0 0.0
    %76 = vmatpush1.msra.mxu0 0.0
    %77 = vmatprep.subr.mxu0 0.0
    %78 = vmatpush1.msra.mxu0 0.0
    %79 = vmatprep.subr.mxu0 0.0
    %80 = vmatpush1.msra.mxu0 0.0
    %81 = vmatprep.subr.mxu0 0.0
    %82 = vmatpush1.msra.mxu0 0.0
    %83 = vmatprep.subr.mxu0 0.0
    %84 = vmatpush1.msra.mxu0 0.0
    %85 = vmatprep.subr.mxu0 0.0
    %86 = vmatpush1.msra.mxu0 0.0
    %87 = vmatprep.subr.mxu0 0.0
    %88 = vmatpush1.msra.mxu0 0.0
    %89 = vmatprep.subr.mxu0 0.0
    %90 = vmatpush1.msra.mxu0 0.0
    %91 = vmatprep.subr.mxu0 0.0
    %92 = vmatpush1.msra.mxu0 0.0
    %93 = vmatprep.subr.mxu0 0.0
    %94 = vmatpush1.msra.mxu0 0.0
    %95 = vmatprep.subr.mxu0 0.0
    %96 = vmatpush1.msra.mxu0 0.0
    %97 = vmatprep.subr.mxu0 0.0
    %98 = vmatpush1.msra.mxu0 0.0
    %99 = vmatprep.subr.mxu0 0.0
    %100 = vmatpush1.msra.mxu0 0.0
    %101 = vmatprep.subr.mxu0 0.0
    %102 = vmatpush1.msra.mxu0 0.0
    %103 = vmatprep.subr.mxu0 0.0
    %104 = vmatpush1.msra.mxu0 0.0
    %105 = vmatprep.subr.mxu0 0.0
    %106 = vmatpush1.msra.mxu0 0.0
    %107 = vmatprep.subr.mxu0 0.0
    %108 = vmatpush1.msra.mxu0 0.0
    %109 = vmatprep.subr.mxu0 0.0
    %110 = vmatpush1.msra.mxu0 0.0
    %111 = vmatprep.subr.mxu0 0.0
    %112 = vmatpush1.msra.mxu0 0.0
    %113 = vmatprep.subr.mxu0 0.0
    %114 = vmatpush1.msra.mxu0 0.0
    %115 = vmatprep.subr.mxu0 0.0
    %116 = vmatpush1.msra.mxu0 0.0
    %117 = vmatprep.subr.mxu0 0.0
    %118 = vmatpush1.msra.mxu0 0.0
    %119 = vmatprep.subr.mxu0 0.0
    %120 = vmatpush1.msra.mxu0 0.0
    %121 = vmatprep.subr.mxu0 0.0
    %122 = vmatpush1.msra.mxu0 0.0
    %123 = vmatprep.subr.mxu0 0.0
    %124 = vmatpush1.msra.mxu0 0.0
    %125 = vmatprep.subr.mxu0 0.0
    %126 = vmatpush1.msra.mxu0 0.0
    %127 = vmatprep.subr.mxu0 0.0
    %128 = vmatpush1.msra.mxu0 0.0
    %129 = vmatprep.subr.mxu0 0.0
    %130 = vmatpush1.msra.mxu0 0.0
    %131 = vmatprep.subr.mxu0 0.0
    %132 = vmatpush1.msra.mxu0 0.0
    %133 = vmatprep.subr.mxu0 0.0
    %134 = vmatpush1.msra.mxu0 0.0
    %135 = vmatprep.mubr.f32.mxu0 0.0
    %136 = vmatmul.mubr.f32.gmra.mrb[0].mxu0 %v69
    %v137 = vpop.f32.mrb[0].mxu0
    %v138 = vadd.f32 0.0, %v137
    %v139 = vpop.f32.mrb[0].mxu0
    %140 = vdwg.mxu0
    %vm141 = vcmask 261120
    %v143 = vsel %vm141, %v138, 0
    %v146 = vsel %vm141, %v60, 0
    %148 = vmatprep.subr.mxu0 0.0
    %149 = vmatpush1.xpose.msra.mxu0 %v146
    %150 = vmatprep.subr.mxu0 0.0
    %151 = vmatpush1.xpose.msra.mxu0 0.0
    %152 = vmatprep.subr.mxu0 0.0
    %153 = vmatpush1.xpose.msra.mxu0 0.0
    %154 = vmatprep.subr.mxu0 0.0
    %155 = vmatpush1.xpose.msra.mxu0 0.0
    %156 = vmatprep.subr.mxu0 0.0
    %157 = vmatpush1.xpose.msra.mxu0 0.0
    %158 = vmatprep.subr.mxu0 0.0
    %159 = vmatpush1.xpose.msra.mxu0 0.0
    %160 = vmatprep.subr.mxu0 0.0
    %161 = vmatpush1.xpose.msra.mxu0 0.0
    %162 = vmatprep.subr.mxu0 0.0
    %163 = vmatpush1.xpose.msra.mxu0 0.0
    %164 = vmatprep.subr.mxu0 0.0
    %165 = vmatpush1.xpose.msra.mxu0 0.0
    %166 = vmatprep.subr.mxu0 0.0
    %167 = vmatpush1.xpose.msra.mxu0 0.0
    %168 = vmatprep.subr.mxu0 0.0
    %169 = vmatpush1.xpose.msra.mxu0 0.0
    %170 = vmatprep.subr.mxu0 0.0
    %171 = vmatpush1.xpose.msra.mxu0 0.0
    %172 = vmatprep.subr.mxu0 0.0
    %173 = vmatpush1.xpose.msra.mxu0 0.0
    %174 = vmatprep.subr.mxu0 0.0
    %175 = vmatpush1.xpose.msra.mxu0 0.0
    %176 = vmatprep.subr.mxu0 0.0
    %177 = vmatpush1.xpose.msra.mxu0 0.0
    %178 = vmatprep.subr.mxu0 0.0
    %179 = vmatpush1.xpose.msra.mxu0 0.0
    %180 = vmatprep.subr.mxu0 0.0
    %181 = vmatpush1.xpose.msra.mxu0 0.0
    %182 = vmatprep.subr.mxu0 0.0
    %183 = vmatpush1.xpose.msra.mxu0 0.0
    %184 = vmatprep.subr.mxu0 0.0
    %185 = vmatpush1.xpose.msra.mxu0 0.0
    %186 = vmatprep.subr.mxu0 0.0
    %187 = vmatpush1.xpose.msra.mxu0 0.0
    %188 = vmatprep.subr.mxu0 0.0
    %189 = vmatpush1.xpose.msra.mxu0 0.0
    %190 = vmatprep.subr.mxu0 0.0
    %191 = vmatpush1.xpose.msra.mxu0 0.0
    %192 = vmatprep.subr.mxu0 0.0
    %193 = vmatpush1.xpose.msra.mxu0 0.0
    %194 = vmatprep.subr.mxu0 0.0
    %195 = vmatpush1.xpose.msra.mxu0 0.0
    %196 = vmatprep.subr.mxu0 0.0
    %197 = vmatpush1.xpose.msra.mxu0 0.0
    %198 = vmatprep.subr.mxu0 0.0
    %199 = vmatpush1.xpose.msra.mxu0 0.0
    %200 = vmatprep.subr.mxu0 0.0
    %201 = vmatpush1.xpose.msra.mxu0 0.0
    %202 = vmatprep.subr.mxu0 0.0
    %203 = vmatpush1.xpose.msra.mxu0 0.0
    %204 = vmatprep.subr.mxu0 0.0
    %205 = vmatpush1.xpose.msra.mxu0 0.0
    %206 = vmatprep.subr.mxu0 0.0
    %207 = vmatpush1.xpose.msra.mxu0 0.0
    %208 = vmatprep.subr.mxu0 0.0
    %209 = vmatpush1.xpose.msra.mxu0 0.0
    %210 = vmatprep.subr.mxu0 0.0
    %211 = vmatpush1.xpose.msra.mxu0 0.0
    %212 = vmatprep.mubr.f32.mxu0 0.0
    %213 = vmatmul.mubr.f32.gmra.mrb[0].mxu0 %v143
    %v214 = vpop.f32.mrb[0].mxu0
    %v215 = vadd.f32 0.0, %v214
    %v216 = vpop.f32.mrb[0].mxu0
    %217 = vdwg.mxu0
    %v219 = vsel %vm141, %v61, 0
    %221 = vmatprep.subr.mxu0 0.0
    %222 = vmatpush1.xpose.msra.mxu0 %v219
    %223 = vmatprep.subr.mxu0 0.0
    %224 = vmatpush1.xpose.msra.mxu0 0.0
    %225 = vmatprep.subr.mxu0 0.0
    %226 = vmatpush1.xpose.msra.mxu0 0.0
    %227 = vmatprep.subr.mxu0 0.0
    %228 = vmatpush1.xpose.msra.mxu0 0.0
    %229 = vmatprep.subr.mxu0 0.0
    %230 = vmatpush1.xpose.msra.mxu0 0.0
    %231 = vmatprep.subr.mxu0 0.0
    %232 = vmatpush1.xpose.msra.mxu0 0.0
    %233 = vmatprep.subr.mxu0 0.0
    %234 = vmatpush1.xpose.msra.mxu0 0.0
    %235 = vmatprep.subr.mxu0 0.0
    %236 = vmatpush1.xpose.msra.mxu0 0.0
    %237 = vmatprep.subr.mxu0 0.0
    %238 = vmatpush1.xpose.msra.mxu0 0.0
    %239 = vmatprep.subr.mxu0 0.0
    %240 = vmatpush1.xpose.msra.mxu0 0.0
    %241 = vmatprep.subr.mxu0 0.0
    %242 = vmatpush1.xpose.msra.mxu0 0.0
    %243 = vmatprep.subr.mxu0 0.0
    %244 = vmatpush1.xpose.msra.mxu0 0.0
    %245 = vmatprep.subr.mxu0 0.0
    %246 = vmatpush1.xpose.msra.mxu0 0.0
    %247 = vmatprep.subr.mxu0 0.0
    %248 = vmatpush1.xpose.msra.mxu0 0.0
    %249 = vmatprep.subr.mxu0 0.0
    %250 = vmatpush1.xpose.msra.mxu0 0.0
    %251 = vmatprep.subr.mxu0 0.0
    %252 = vmatpush1.xpose.msra.mxu0 0.0
    %253 = vmatprep.subr.mxu0 0.0
    %254 = vmatpush1.xpose.msra.mxu0 0.0
    %255 = vmatprep.subr.mxu0 0.0
    %256 = vmatpush1.xpose.msra.mxu0 0.0
    %257 = vmatprep.subr.mxu0 0.0
    %258 = vmatpush1.xpose.msra.mxu0 0.0
    %259 = vmatprep.subr.mxu0 0.0
    %260 = vmatpush1.xpose.msra.mxu0 0.0
    %261 = vmatprep.subr.mxu0 0.0
    %262 = vmatpush1.xpose.msra.mxu0 0.0
    %263 = vmatprep.subr.mxu0 0.0
    %264 = vmatpush1.xpose.msra.mxu0 0.0
    %265 = vmatprep.subr.mxu0 0.0
    %266 = vmatpush1.xpose.msra.mxu0 0.0
    %267 = vmatprep.subr.mxu0 0.0
    %268 = vmatpush1.xpose.msra.mxu0 0.0
    %269 = vmatprep.subr.mxu0 0.0
    %270 = vmatpush1.xpose.msra.mxu0 0.0
    %271 = vmatprep.subr.mxu0 0.0
    %272 = vmatpush1.xpose.msra.mxu0 0.0
    %273 = vmatprep.subr.mxu0 0.0
    %274 = vmatpush1.xpose.msra.mxu0 0.0
    %275 = vmatprep.subr.mxu0 0.0
    %276 = vmatpush1.xpose.msra.mxu0 0.0
    %277 = vmatprep.subr.mxu0 0.0
    %278 = vmatpush1.xpose.msra.mxu0 0.0
    %279 = vmatprep.subr.mxu0 0.0
    %280 = vmatpush1.xpose.msra.mxu0 0.0
    %281 = vmatprep.subr.mxu0 0.0
    %282 = vmatpush1.xpose.msra.mxu0 0.0
    %283 = vmatprep.subr.mxu0 0.0
    %284 = vmatpush1.xpose.msra.mxu0 0.0
    %285 = vmatprep.mubr.f32.mxu0 0.0
    %286 = vmatmul.mubr.f32.gmra.mrb[0].mxu0 %v143
    %v287 = vpop.f32.mrb[0].mxu0
    %v288 = vadd.f32 0.0, %v287
    %v289 = vpop.f32.mrb[0].mxu0
    %290 = vdwg.mxu0
    %vm291 = vcmask 60416
    %v292 = vsel %vm291, %v215, -inf
    %293 = vmax.xlane.f32.xlu0 %v292
    %v294 = vpop.xlane.xlu0 %293
    %v295 = vsel %vm291, %v288, -inf
    %296 = vmax.xlane.f32.xlu0 %v295
    %v297 = vpop.xlane.xlu0 %296
    %v298 = vsub.f32 %v215, %v294
    %v299 = vsub.f32 %v288, %v297
    %v300 = vmul.f32 %v298, 1.442695
    %v301 = vpow.pop %v300
    %v302 = vmul.f32 %v299, 1.442695
    %v303 = vpow.pop %v302
    %v304 = vsel %vm291, %v301, 0.0
    %305 = vadd.xlane.f32.xlu0 %v304
    %v306 = vpop.xlane.xlu0 %305
    %v307 = vsel %vm291, %v303, 0.0
    %308 = vadd.xlane.f32.xlu0 %v307
    %v309 = vpop.xlane.xlu0 %308
    %v310 = vrcp.pop %v306
    %v311 = vrcp.pop %v309
    %v312 = vmul.f32 %v301, %v310
    %v313 = vmul.f32 %v303, %v311
    %vm314 = vcmask 64512
    %v316 = vsel %vm314, %v312, 0
    %318 = vmatprep.subr.mxu0 0.0
    %319 = vmatpush1.msra.mxu0 %v60
    %320 = vmatprep.subr.mxu0 0.0
    %321 = vmatpush1.msra.mxu0 0.0
    %322 = vmatprep.subr.mxu0 0.0
    %323 = vmatpush1.msra.mxu0 0.0
    %324 = vmatprep.subr.mxu0 0.0
    %325 = vmatpush1.msra.mxu0 0.0
    %326 = vmatprep.subr.mxu0 0.0
    %327 = vmatpush1.msra.mxu0 0.0
    %328 = vmatprep.subr.mxu0 0.0
    %329 = vmatpush1.msra.mxu0 0.0
    %330 = vmatprep.subr.mxu0 0.0
    %331 = vmatpush1.msra.mxu0 0.0
    %332 = vmatprep.subr.mxu0 0.0
    %333 = vmatpush1.msra.mxu0 0.0
    %334 = vmatprep.subr.mxu0 0.0
    %335 = vmatpush1.msra.mxu0 0.0
    %336 = vmatprep.subr.mxu0 0.0
    %337 = vmatpush1.msra.mxu0 0.0
    %338 = vmatprep.subr.mxu0 0.0
    %339 = vmatpush1.msra.mxu0 0.0
    %340 = vmatprep.subr.mxu0 0.0
    %341 = vmatpush1.msra.mxu0 0.0
    %342 = vmatprep.subr.mxu0 0.0
    %343 = vmatpush1.msra.mxu0 0.0
    %344 = vmatprep.subr.mxu0 0.0
    %345 = vmatpush1.msra.mxu0 0.0
    %346 = vmatprep.subr.mxu0 0.0
    %347 = vmatpush1.msra.mxu0 0.0
    %348 = vmatprep.subr.mxu0 0.0
    %349 = vmatpush1.msra.mxu0 0.0
    %350 = vmatprep.subr.mxu0 0.0
    %351 = vmatpush1.msra.mxu0 0.0
    %352 = vmatprep.subr.mxu0 0.0
    %353 = vmatpush1.msra.mxu0 0.0
    %354 = vmatprep.subr.mxu0 0.0
    %355 = vmatpush1.msra.mxu0 0.0
    %356 = vmatprep.subr.mxu0 0.0
    %357 = vmatpush1.msra.mxu0 0.0
    %358 = vmatprep.subr.mxu0 0.0
    %359 = vmatpush1.msra.mxu0 0.0
    %360 = vmatprep.subr.mxu0 0.0
    %361 = vmatpush1.msra.mxu0 0.0
    %362 = vmatprep.subr.mxu0 0.0
    %363 = vmatpush1.msra.mxu0 0.0
    %364 = vmatprep.subr.mxu0 0.0
    %365 = vmatpush1.msra.mxu0 0.0
    %366 = vmatprep.subr.mxu0 0.0
    %367 = vmatpush1.msra.mxu0 0.0
    %368 = vmatprep.subr.mxu0 0.0
    %369 = vmatpush1.msra.mxu0 0.0
    %370 = vmatprep.subr.mxu0 0.0
    %371 = vmatpush1.msra.mxu0 0.0
    %372 = vmatprep.subr.mxu0 0.0
    %373 = vmatpush1.msra.mxu0 0.0
    %374 = vmatprep.subr.mxu0 0.0
    %375 = vmatpush1.msra.mxu0 0.0
    %376 = vmatprep.subr.mxu0 0.0
    %377 = vmatpush1.msra.mxu0 0.0
    %378 = vmatprep.subr.mxu0 0.0
    %379 = vmatpush1.msra.mxu0 0.0
    %380 = vmatprep.subr.mxu0 0.0
    %381 = vmatpush1.msra.mxu0 0.0
    %382 = vmatprep.mubr.f32.mxu0 0.0
    %383 = vmatmul.mubr.f32.gmra.mrb[0].mxu0 %v316
    %v384 = vpop.f32.mrb[0].mxu0
    %v385 = vadd.f32 0.0, %v384
    %v386 = vpop.f32.mrb[0].mxu0
    %387 = vdwg.mxu0
    %v389 = vsel %vm314, %v313, 0
    %391 = vmatprep.subr.mxu0 0.0
    %392 = vmatpush1.msra.mxu0 %v61
    %393 = vmatprep.subr.mxu0 0.0
    %394 = vmatpush1.msra.mxu0 0.0
    %395 = vmatprep.subr.mxu0 0.0
    %396 = vmatpush1.msra.mxu0 0.0
    %397 = vmatprep.subr.mxu0 0.0
    %398 = vmatpush1.msra.mxu0 0.0
    %399 = vmatprep.subr.mxu0 0.0
    %400 = vmatpush1.msra.mxu0 0.0
    %401 = vmatprep.subr.mxu0 0.0
    %402 = vmatpush1.msra.mxu0 0.0
    %403 = vmatprep.subr.mxu0 0.0
    %404 = vmatpush1.msra.mxu0 0.0
    %405 = vmatprep.subr.mxu0 0.0
    %406 = vmatpush1.msra.mxu0 0.0
    %407 = vmatprep.subr.mxu0 0.0
    %408 = vmatpush1.msra.mxu0 0.0
    %409 = vmatprep.subr.mxu0 0.0
    %410 = vmatpush1.msra.mxu0 0.0
    %411 = vmatprep.subr.mxu0 0.0
    %412 = vmatpush1.msra.mxu0 0.0
    %413 = vmatprep.subr.mxu0 0.0
    %414 = vmatpush1.msra.mxu0 0.0
    %415 = vmatprep.subr.mxu0 0.0
    %416 = vmatpush1.msra.mxu0 0.0
    %417 = vmatprep.subr.mxu0 0.0
    %418 = vmatpush1.msra.mxu0 0.0
    %419 = vmatprep.subr.mxu0 0.0
    %420 = vmatpush1.msra.mxu0 0.0
    %421 = vmatprep.subr.mxu0 0.0
    %422 = vmatpush1.msra.mxu0 0.0
    %423 = vmatprep.subr.mxu0 0.0
    %424 = vmatpush1.msra.mxu0 0.0
    %425 = vmatprep.subr.mxu0 0.0
    %426 = vmatpush1.msra.mxu0 0.0
    %427 = vmatprep.subr.mxu0 0.0
    %428 = vmatpush1.msra.mxu0 0.0
    %429 = vmatprep.subr.mxu0 0.0
    %430 = vmatpush1.msra.mxu0 0.0
    %431 = vmatprep.subr.mxu0 0.0
    %432 = vmatpush1.msra.mxu0 0.0
    %433 = vmatprep.subr.mxu0 0.0
    %434 = vmatpush1.msra.mxu0 0.0
    %435 = vmatprep.subr.mxu0 0.0
    %436 = vmatpush1.msra.mxu0 0.0
    %437 = vmatprep.subr.mxu0 0.0
    %438 = vmatpush1.msra.mxu0 0.0
    %439 = vmatprep.subr.mxu0 0.0
    %440 = vmatpush1.msra.mxu0 0.0
    %441 = vmatprep.subr.mxu0 0.0
    %442 = vmatpush1.msra.mxu0 0.0
    %443 = vmatprep.subr.mxu0 0.0
    %444 = vmatpush1.msra.mxu0 0.0
    %445 = vmatprep.subr.mxu0 0.0
    %446 = vmatpush1.msra.mxu0 0.0
    %447 = vmatprep.subr.mxu0 0.0
    %448 = vmatpush1.msra.mxu0 0.0
    %449 = vmatprep.subr.mxu0 0.0
    %450 = vmatpush1.msra.mxu0 0.0
    %451 = vmatprep.subr.mxu0 0.0
    %452 = vmatpush1.msra.mxu0 0.0
    %453 = vmatprep.subr.mxu0 0.0
    %454 = vmatpush1.msra.mxu0 0.0
    %455 = vmatprep.mubr.f32.mxu0 0.0
    %456 = vmatmul.mubr.f32.gmra.mrb[0].mxu0 %v389
    %v457 = vpop.f32.mrb[0].mxu0
    %v458 = vadd.f32 0.0, %v457
    %v459 = vpop.f32.mrb[0].mxu0
    %460 = vdwg.mxu0
    %vm461 = vcmask 257024
    %v462 = vsel %vm461, %v385, 0.0
    %463 = vadd.xlane.f32.xlu0 %v462
    %v464 = vpop.xlane.xlu0 %463
    %v465 = vsel %vm461, %v458, 0.0
    %466 = vadd.xlane.f32.xlu0 %v465
    %v467 = vpop.xlane.xlu0 %466
    %v468 = vrcp.pop 32.0
    %v469 = vmul.f32 %v464, %v468
    %v470 = vmul.f32 %v467, %v468
    %v471 = vsub.f32 %v385, %v469
    %v472 = vsub.f32 %v458, %v470
    %v473 = vmul.f32 %v471, %v471
    %v474 = vmul.f32 %v472, %v472
    %v475 = vsel %vm461, %v473, 0.0
    %476 = vadd.xlane.f32.xlu0 %v475
    %v477 = vpop.xlane.xlu0 %476
    %v478 = vsel %vm461, %v474, 0.0
    %479 = vadd.xlane.f32.xlu0 %v478
    %v480 = vpop.xlane.xlu0 %479
    %v481 = vmul.f32 %v477, %v468
    %v482 = vmul.f32 %v480, %v468
    %v483 = vadd.f32 %v481, 1e-05
    %v484 = vadd.f32 %v482, 1e-05
    %v485 = vrsqrt.pop %v483
    %v486 = vrsqrt.pop %v484
    %v487 = vmul.f32 %v471, %v485
    %v488 = vmul.f32 %v472, %v486
    %v490 = vlaneseq
    %v491 = vshrl.u32 %v490, 7
    %v492 = vsub.s32 0, %v491
    %v493 = vrot.slane %v62, %v492
    %v495 = vmul.f32 %v487, %v493
    %v496 = vmul.f32 %v488, %v493
    %v498 = vlaneseq
    %v499 = vshrl.u32 %v498, 7
    %v500 = vsub.s32 0, %v499
    %v501 = vrot.slane %v63, %v500
    %v503 = vadd.f32 %v495, %v501
    %v505 = vunpack.c.l.s4 1983009808
    %v506 = vunpack.c.0.s8 %v505
    %v507 = vlaneseq
    %v508 = vshrl.u32 %v507, 7
    %v509 = vsub.s32 %v506, %v508
    %v510 = vrot.slane %v503, %v509
    %v511 = vadd.f32 %v496, %v501
    %v513 = vunpack.c.l.s4 1983009808
    %v514 = vunpack.c.0.s8 %v513
    %v515 = vlaneseq
    %v516 = vshrl.u32 %v515, 7
    %v517 = vsub.s32 %v514, %v516
    %v518 = vrot.slane %v511, %v517
    %v519 = vcombine.low %v510, %v518
    %v520 = vcombine.high %v510, %v518
    %v522 = vunpack.c.l.s4 1934713408
    %v523 = vunpack.c.0.s8 %v522
    %v524 = vlaneseq
    %v525 = vshrl.u32 %v524, 7
    %v526 = vsub.s32 %v523, %v525
    %v527 = vrot.slane %v519, %v526
    %v529 = vunpack.c.l.s4 1934713408
    %v530 = vunpack.c.0.s8 %v529
    %v531 = vlaneseq
    %v532 = vshrl.u32 %v531, 7
    %v533 = vsub.s32 %v530, %v532
    %v534 = vrot.slane %v520, %v533
    %v535 = vcombine.high %v527, 0.0
    %v536 = vcombine.high %v534, 0.0
    %538 = vrot.lane.b32.xlu0 %v535, 32
    %v539 = vpop.permute.xlu0 %538
    %542 = vrot.lane.b32.xlu0 %v534, 64
    %v543 = vpop.permute.xlu0 %542
    %546 = vrot.lane.b32.xlu0 %v536, 96
    %v547 = vpop.permute.xlu0 %546
    %v549 = vsel %vm141, %v527, %v539
    %vm550 = vcmask 523264
    %v551 = vsel %vm550, %v549, %v543
    %vm552 = vcmask 785408
    %v553 = vsel %vm552, %v551, %v547
    %554 = vst [vmem:[#allocation8] sm:$0x3] %v553
    // Predicated region
    $region34: #{tpu_custom_call.1} parent=1 // pred_check
      _
    $region35: #{tpu_custom_call.1} parent=1 // pred_check_branch
      %556 = sbr.rel (0) target = $region37
    $region36: #{tpu_custom_call.1} parent=1 // pred_region
      %s558 = ssub.s32 32, 32
      %559 = vsyncadd [#allocation4], %s558
      %s561 = sshll.u32 [#allocation8], 4
      %s562 = int_to_ptr.vmem [resolvable:$true] %s561
      %564 = dma.vmem_to_hbm [thread:$0]  %s562, 32, %s5, [#allocation4]
    $region37: #{tpu_custom_call.1} parent=1 // pred_fallthru
      _
    // Predicated region
    $region38: #{tpu_custom_call.1} parent=1 // pred_check
      _
    $region39: #{tpu_custom_call.1} parent=1 // pred_check_branch
      %566 = sbr.rel (0) target = $region41
    $region40: #{tpu_custom_call.1} parent=1 // pred_region
      %567 = dma.done [#allocation4], 32
    $region41: #{tpu_custom_call.1} parent=1 // pred_fallthru
      _
    %568 = vsyncpa [#allocation3], 1
    %569 = vsyncpa [#allocation6], 1
    %570 = vsyncpa [#allocation4], 1

// kernel: tpu_custom_call.1
$region0: #{tpu_custom_call.1}
  #allocation0 [shape = 'u32[]', space=smem, size = 0x4, offset = 0x4, fixed_abs, tag = 'smem constant byte address 0x4 - core index']
  #allocation1 [shape = 'u32[144,128]{1,0:T(1,128)}', space=vmem, size = 0x12000, scoped, tag = 'internal scratch']
  %s0 = inlined_call_operand.hbm [shape: f32[2,8,32], index: 0, kind: input, shape index: {}]
  %s1 = inlined_call_operand.hbm [shape: f32[4,16], index: 1, kind: input, shape index: {}]
  %s2 = inlined_call_operand.hbm [shape: f32[16,32], index: 2, kind: input, shape index: {}]
  %s3 = inlined_call_operand.vmem [shape: f32[1,32], index: 3, kind: input, shape index: {}]
  %s4 = inlined_call_operand.vmem [shape: f32[1,32], index: 4, kind: input, shape index: {}]
  %s5 = inlined_call_operand.hbm [shape: f32[2,4,32], index: 5, kind: output, shape index: {}]
  %s6 = sld [smem:[#allocation0]]
  $region42: #{tpu_custom_call.1} parent=0
    _
  %s8 = ssub.s32 1, %s6
  %s9 = scalar_select 0, %s8, %s6
  $region1: #{tpu_custom_call.1} parent=0
    #allocation2 [shape = 'u8[8192]{0}', space=vmem, size = 0x2000, scoped, tag = 'input window, operand 0, single buffered']
    #allocation3 [shape = 's32[1]{0}', space=sflag, size = 0x4, scoped, tag = 'scoped memory for tpu_custom_call.1']
    #allocation4 [shape = 's32[1]{0}', space=sflag, size = 0x4, scoped, tag = 'scoped memory for tpu_custom_call.1']
    #allocation5 [shape = 'u8[2048]{0}', space=vmem, size = 0x800, scoped, tag = 'input window, operand 1, single buffered']
    #allocation6 [shape = 's32[1]{0}', space=sflag, size = 0x4, scoped, tag = 'scoped memory for tpu_custom_call.1']
    #allocation7 [shape = 'u8[8192]{0}', space=vmem, size = 0x2000, scoped, tag = 'input window, operand 2, single buffered']
    #allocation8 [shape = 'u8[4096]{0}', space=vmem, size = 0x1000, scoped, tag = 'output window, operand 0, single buffered']
    %10 = vsyncpa [#allocation3], 0
    %11 = vsyncpa [#allocation6], 0
    %12 = vsyncpa [#allocation4], 0
    // Predicated region
    $region2: #{tpu_custom_call.1} parent=1 // pred_check
      _
    $region3: #{tpu_custom_call.1} parent=1 // pred_check_branch
      %14 = sbr.rel (0) target = $region5
    $region4: #{tpu_custom_call.1} parent=1 // pred_region
      %s16 = ssub.s32 256, 256
      %17 = vsyncadd [#allocation3], %s16
      %s18 = sshll.u32 [#allocation2], 4
      %s19 = int_to_ptr.vmem [resolvable:$true] %s18
      %24 = dma.hbm_to_vmem [thread:$0]  %s0, 256, %s19, [#allocation3], 128, 128, 8
    $region5: #{tpu_custom_call.1} parent=1 // pred_fallthru
      _
    // Predicated region
    $region6: #{tpu_custom_call.1} parent=1 // pred_check
      _
    $region7: #{tpu_custom_call.1} parent=1 // pred_check_branch
      %26 = sbr.rel (0) target = $region9
    $region8: #{tpu_custom_call.1} parent=1 // pred_region
      %s28 = ssub.s32 64, 64
      %29 = vsyncadd [#allocation6], %s28
      %s31 = sshll.u32 [#allocation5], 4
      %s32 = int_to_ptr.vmem [resolvable:$true] %s31
      %34 = dma.hbm_to_vmem [thread:$0]  %s1, 64, %s32, [#allocation6]
    $region9: #{tpu_custom_call.1} parent=1 // pred_fallthru
      _
    // Predicated region
    $region10: #{tpu_custom_call.1} parent=1 // pred_check
      _
    $region11: #{tpu_custom_call.1} parent=1 // pred_check_branch
      %36 = sbr.rel (0) target = $region13
    $region12: #{tpu_custom_call.1} parent=1 // pred_region
      %s38 = ssub.s32 256, 256
      %39 = vsyncadd [#allocation6], %s38
      %s40 = sshll.u32 [#allocation7], 4
      %s41 = int_to_ptr.vmem [resolvable:$true] %s40
      %46 = dma.hbm_to_vmem [thread:$0]  %s2, 256, %s41, [#allocation6], 128, 128, 8
    $region13: #{tpu_custom_call.1} parent=1 // pred_fallthru
      _
    // Predicated region
    $region14: #{tpu_custom_call.1} parent=1 // pred_check
      _
    $region15: #{tpu_custom_call.1} parent=1 // pred_check_branch
      %48 = sbr.rel (0) target = $region17
    $region16: #{tpu_custom_call.1} parent=1 // pred_region
      _
    $region17: #{tpu_custom_call.1} parent=1 // pred_fallthru
      _
    // Predicated region
    $region18: #{tpu_custom_call.1} parent=1 // pred_check
      _
    $region19: #{tpu_custom_call.1} parent=1 // pred_check_branch
      %50 = sbr.rel (0) target = $region21
    $region20: #{tpu_custom_call.1} parent=1 // pred_region
      _
    $region21: #{tpu_custom_call.1} parent=1 // pred_fallthru
      _
    // Predicated region
    $region22: #{tpu_custom_call.1} parent=1 // pred_check
      _
    $region23: #{tpu_custom_call.1} parent=1 // pred_check_branch
      %52 = sbr.rel (0) target = $region25
    $region24: #{tpu_custom_call.1} parent=1 // pred_region
      %53 = dma.done [#allocation3], 256
    $region25: #{tpu_custom_call.1} parent=1 // pred_fallthru
      _
    // Predicated region
    $region26: #{tpu_custom_call.1} parent=1 // pred_check
      _
    $region27: #{tpu_custom_call.1} parent=1 // pred_check_branch
      %55 = sbr.rel (0) target = $region29
    $region28: #{tpu_custom_call.1} parent=1 // pred_region
      %56 = dma.done [#allocation6], 64
    $region29: #{tpu_custom_call.1} parent=1 // pred_fallthru
      _
    // Predicated region
    $region30: #{tpu_custom_call.1} parent=1 // pred_check
      _
    $region31: #{tpu_custom_call.1} parent=1 // pred_check_branch
      %58 = sbr.rel (0) target = $region33
    $region32: #{tpu_custom_call.1} parent=1 // pred_region
      %59 = dma.done [#allocation6], 256
    $region33: #{tpu_custom_call.1} parent=1 // pred_fallthru
      _
    %v60 = vld [vmem:[#allocation2] sm:$0xff]
    %v61 = vld [vmem:[#allocation2 + $0x8] sm:$0xff]
    %v62 = vld [vmem:[%s3] sm:$0x1]
    %v63 = vld [vmem:[%s4] sm:$0x1]
    %v64 = vld [vmem:[#allocation5] sm:$0xf]
    %v65 = vld [vmem:[#allocation7] sm:$0xff]
    %v66 = vld [vmem:[#allocation7 + $0x8] sm:$0xff]
    %vm67 = vcmask 130048
    %v69 = vsel %vm67, %v64, 0
    %71 = vmatprep.subr.mxu0 0.0
    %72 = vmatpush1.msra.mxu0 %v65
    %73 = vmatprep.subr.mxu0 0.0
    %74 = vmatpush1.msra.mxu0 %v66
    %75 = vmatprep.subr.mxu0 0.0
    %76 = vmatpush1.msra.mxu0 0.0
    %77 = vmatprep.subr.mxu0 0.0
    %78 = vmatpush1.msra.mxu0 0.0
    %79 = vmatprep.subr.mxu0 0.0
    %80 = vmatpush1.msra.mxu0 0.0
    %81 = vmatprep.subr.mxu0 0.0
    %82 = vmatpush1.msra.mxu0 0.0
    %83 = vmatprep.subr.mxu0 0.0
    %84 = vmatpush1.msra.mxu0 0.0
    %85 = vmatprep.subr.mxu0 0.0
    %86 = vmatpush1.msra.mxu0 0.0
    %87 = vmatprep.subr.mxu0 0.0
    %88 = vmatpush1.msra.mxu0 0.0
    %89 = vmatprep.subr.mxu0 0.0
    %90 = vmatpush1.msra.mxu0 0.0
    %91 = vmatprep.subr.mxu0 0.0
    %92 = vmatpush1.msra.mxu0 0.0
    %93 = vmatprep.subr.mxu0 0.0
    %94 = vmatpush1.msra.mxu0 0.0
    %95 = vmatprep.subr.mxu0 0.0
    %96 = vmatpush1.msra.mxu0 0.0
    %97 = vmatprep.subr.mxu0 0.0
    %98 = vmatpush1.msra.mxu0 0.0
    %99 = vmatprep.subr.mxu0 0.0
    %100 = vmatpush1.msra.mxu0 0.0
    %101 = vmatprep.subr.mxu0 0.0
    %102 = vmatpush1.msra.mxu0 0.0
    %103 = vmatprep.subr.mxu0 0.0
    %104 = vmatpush1.msra.mxu0 0.0
    %105 = vmatprep.subr.mxu0 0.0
    %106 = vmatpush1.msra.mxu0 0.0
    %107 = vmatprep.subr.mxu0 0.0
    %108 = vmatpush1.msra.mxu0 0.0
    %109 = vmatprep.subr.mxu0 0.0
    %110 = vmatpush1.msra.mxu0 0.0
    %111 = vmatprep.subr.mxu0 0.0
    %112 = vmatpush1.msra.mxu0 0.0
    %113 = vmatprep.subr.mxu0 0.0
    %114 = vmatpush1.msra.mxu0 0.0
    %115 = vmatprep.subr.mxu0 0.0
    %116 = vmatpush1.msra.mxu0 0.0
    %117 = vmatprep.subr.mxu0 0.0
    %118 = vmatpush1.msra.mxu0 0.0
    %119 = vmatprep.subr.mxu0 0.0
    %120 = vmatpush1.msra.mxu0 0.0
    %121 = vmatprep.subr.mxu0 0.0
    %122 = vmatpush1.msra.mxu0 0.0
    %123 = vmatprep.subr.mxu0 0.0
    %124 = vmatpush1.msra.mxu0 0.0
    %125 = vmatprep.subr.mxu0 0.0
    %126 = vmatpush1.msra.mxu0 0.0
    %127 = vmatprep.subr.mxu0 0.0
    %128 = vmatpush1.msra.mxu0 0.0
    %129 = vmatprep.subr.mxu0 0.0
    %130 = vmatpush1.msra.mxu0 0.0
    %131 = vmatprep.subr.mxu0 0.0
    %132 = vmatpush1.msra.mxu0 0.0
    %133 = vmatprep.subr.mxu0 0.0
    %134 = vmatpush1.msra.mxu0 0.0
    %135 = vmatprep.mubr.f32.mxu0 0.0
    %136 = vmatmul.mubr.f32.gmra.mrb[0].mxu0 %v69
    %v137 = vpop.f32.mrb[0].mxu0
    %v138 = vadd.f32 0.0, %v137
    %v139 = vpop.f32.mrb[0].mxu0
    %140 = vdwg.mxu0
    %vm141 = vcmask 261120
    %v143 = vsel %vm141, %v138, 0
    %v146 = vsel %vm141, %v60, 0
    %148 = vmatprep.subr.mxu0 0.0
    %149 = vmatpush1.xpose.msra.mxu0 %v146
    %150 = vmatprep.subr.mxu0 0.0
    %151 = vmatpush1.xpose.msra.mxu0 0.0
    %152 = vmatprep.subr.mxu0 0.0
    %153 = vmatpush1.xpose.msra.mxu0 0.0
    %154 = vmatprep.subr.mxu0 0.0
    %155 = vmatpush1.xpose.msra.mxu0 0.0
    %156 = vmatprep.subr.mxu0 0.0
    %157 = vmatpush1.xpose.msra.mxu0 0.0
    %158 = vmatprep.subr.mxu0 0.0
    %159 = vmatpush1.xpose.msra.mxu0 0.0
    %160 = vmatprep.subr.mxu0 0.0
    %161 = vmatpush1.xpose.msra.mxu0 0.0
    %162 = vmatprep.subr.mxu0 0.0
    %163 = vmatpush1.xpose.msra.mxu0 0.0
    %164 = vmatprep.subr.mxu0 0.0
    %165 = vmatpush1.xpose.msra.mxu0 0.0
    %166 = vmatprep.subr.mxu0 0.0
    %167 = vmatpush1.xpose.msra.mxu0 0.0
    %168 = vmatprep.subr.mxu0 0.0
    %169 = vmatpush1.xpose.msra.mxu0 0.0
    %170 = vmatprep.subr.mxu0 0.0
    %171 = vmatpush1.xpose.msra.mxu0 0.0
    %172 = vmatprep.subr.mxu0 0.0
    %173 = vmatpush1.xpose.msra.mxu0 0.0
    %174 = vmatprep.subr.mxu0 0.0
    %175 = vmatpush1.xpose.msra.mxu0 0.0
    %176 = vmatprep.subr.mxu0 0.0
    %177 = vmatpush1.xpose.msra.mxu0 0.0
    %178 = vmatprep.subr.mxu0 0.0
    %179 = vmatpush1.xpose.msra.mxu0 0.0
    %180 = vmatprep.subr.mxu0 0.0
    %181 = vmatpush1.xpose.msra.mxu0 0.0
    %182 = vmatprep.subr.mxu0 0.0
    %183 = vmatpush1.xpose.msra.mxu0 0.0
    %184 = vmatprep.subr.mxu0 0.0
    %185 = vmatpush1.xpose.msra.mxu0 0.0
    %186 = vmatprep.subr.mxu0 0.0
    %187 = vmatpush1.xpose.msra.mxu0 0.0
    %188 = vmatprep.subr.mxu0 0.0
    %189 = vmatpush1.xpose.msra.mxu0 0.0
    %190 = vmatprep.subr.mxu0 0.0
    %191 = vmatpush1.xpose.msra.mxu0 0.0
    %192 = vmatprep.subr.mxu0 0.0
    %193 = vmatpush1.xpose.msra.mxu0 0.0
    %194 = vmatprep.subr.mxu0 0.0
    %195 = vmatpush1.xpose.msra.mxu0 0.0
    %196 = vmatprep.subr.mxu0 0.0
    %197 = vmatpush1.xpose.msra.mxu0 0.0
    %198 = vmatprep.subr.mxu0 0.0
    %199 = vmatpush1.xpose.msra.mxu0 0.0
    %200 = vmatprep.subr.mxu0 0.0
    %201 = vmatpush1.xpose.msra.mxu0 0.0
    %202 = vmatprep.subr.mxu0 0.0
    %203 = vmatpush1.xpose.msra.mxu0 0.0
    %204 = vmatprep.subr.mxu0 0.0
    %205 = vmatpush1.xpose.msra.mxu0 0.0
    %206 = vmatprep.subr.mxu0 0.0
    %207 = vmatpush1.xpose.msra.mxu0 0.0
    %208 = vmatprep.subr.mxu0 0.0
    %209 = vmatpush1.xpose.msra.mxu0 0.0
    %210 = vmatprep.subr.mxu0 0.0
    %211 = vmatpush1.xpose.msra.mxu0 0.0
    %212 = vmatprep.mubr.f32.mxu0 0.0
    %213 = vmatmul.mubr.f32.gmra.mrb[0].mxu0 %v143
    %v214 = vpop.f32.mrb[0].mxu0
    %v215 = vadd.f32 0.0, %v214
    %v216 = vpop.f32.mrb[0].mxu0
    %217 = vdwg.mxu0
    %v219 = vsel %vm141, %v61, 0
    %221 = vmatprep.subr.mxu0 0.0
    %222 = vmatpush1.xpose.msra.mxu0 %v219
    %223 = vmatprep.subr.mxu0 0.0
    %224 = vmatpush1.xpose.msra.mxu0 0.0
    %225 = vmatprep.subr.mxu0 0.0
    %226 = vmatpush1.xpose.msra.mxu0 0.0
    %227 = vmatprep.subr.mxu0 0.0
    %228 = vmatpush1.xpose.msra.mxu0 0.0
    %229 = vmatprep.subr.mxu0 0.0
    %230 = vmatpush1.xpose.msra.mxu0 0.0
    %231 = vmatprep.subr.mxu0 0.0
    %232 = vmatpush1.xpose.msra.mxu0 0.0
    %233 = vmatprep.subr.mxu0 0.0
    %234 = vmatpush1.xpose.msra.mxu0 0.0
    %235 = vmatprep.subr.mxu0 0.0
    %236 = vmatpush1.xpose.msra.mxu0 0.0
    %237 = vmatprep.subr.mxu0 0.0
    %238 = vmatpush1.xpose.msra.mxu0 0.0
    %239 = vmatprep.subr.mxu0 0.0
    %240 = vmatpush1.xpose.msra.mxu0 0.0
    %241 = vmatprep.subr.mxu0 0.0
    %242 = vmatpush1.xpose.msra.mxu0 0.0
    %243 = vmatprep.subr.mxu0 0.0
    %244 = vmatpush1.xpose.msra.mxu0 0.0
    %245 = vmatprep.subr.mxu0 0.0
    %246 = vmatpush1.xpose.msra.mxu0 0.0
    %247 = vmatprep.subr.mxu0 0.0
    %248 = vmatpush1.xpose.msra.mxu0 0.0
    %249 = vmatprep.subr.mxu0 0.0
    %250 = vmatpush1.xpose.msra.mxu0 0.0
    %251 = vmatprep.subr.mxu0 0.0
    %252 = vmatpush1.xpose.msra.mxu0 0.0
    %253 = vmatprep.subr.mxu0 0.0
    %254 = vmatpush1.xpose.msra.mxu0 0.0
    %255 = vmatprep.subr.mxu0 0.0
    %256 = vmatpush1.xpose.msra.mxu0 0.0
    %257 = vmatprep.subr.mxu0 0.0
    %258 = vmatpush1.xpose.msra.mxu0 0.0
    %259 = vmatprep.subr.mxu0 0.0
    %260 = vmatpush1.xpose.msra.mxu0 0.0
    %261 = vmatprep.subr.mxu0 0.0
    %262 = vmatpush1.xpose.msra.mxu0 0.0
    %263 = vmatprep.subr.mxu0 0.0
    %264 = vmatpush1.xpose.msra.mxu0 0.0
    %265 = vmatprep.subr.mxu0 0.0
    %266 = vmatpush1.xpose.msra.mxu0 0.0
    %267 = vmatprep.subr.mxu0 0.0
    %268 = vmatpush1.xpose.msra.mxu0 0.0
    %269 = vmatprep.subr.mxu0 0.0
    %270 = vmatpush1.xpose.msra.mxu0 0.0
    %271 = vmatprep.subr.mxu0 0.0
    %272 = vmatpush1.xpose.msra.mxu0 0.0
    %273 = vmatprep.subr.mxu0 0.0
    %274 = vmatpush1.xpose.msra.mxu0 0.0
    %275 = vmatprep.subr.mxu0 0.0
    %276 = vmatpush1.xpose.msra.mxu0 0.0
    %277 = vmatprep.subr.mxu0 0.0
    %278 = vmatpush1.xpose.msra.mxu0 0.0
    %279 = vmatprep.subr.mxu0 0.0
    %280 = vmatpush1.xpose.msra.mxu0 0.0
    %281 = vmatprep.subr.mxu0 0.0
    %282 = vmatpush1.xpose.msra.mxu0 0.0
    %283 = vmatprep.subr.mxu0 0.0
    %284 = vmatpush1.xpose.msra.mxu0 0.0
    %285 = vmatprep.mubr.f32.mxu0 0.0
    %286 = vmatmul.mubr.f32.gmra.mrb[0].mxu0 %v143
    %v287 = vpop.f32.mrb[0].mxu0
    %v288 = vadd.f32 0.0, %v287
    %v289 = vpop.f32.mrb[0].mxu0
    %290 = vdwg.mxu0
    %vm291 = vcmask 60416
    %v292 = vsel %vm291, %v215, -inf
    %293 = vmax.xlane.f32.xlu0 %v292
    %v294 = vpop.xlane.xlu0 %293
    %v295 = vsel %vm291, %v288, -inf
    %296 = vmax.xlane.f32.xlu0 %v295
    %v297 = vpop.xlane.xlu0 %296
    %v298 = vsub.f32 %v215, %v294
    %v299 = vsub.f32 %v288, %v297
    %v300 = vmul.f32 %v298, 1.442695
    %v301 = vpow.pop %v300
    %v302 = vmul.f32 %v299, 1.442695
    %v303 = vpow.pop %v302
    %v304 = vsel %vm291, %v301, 0.0
    %305 = vadd.xlane.f32.xlu0 %v304
    %v306 = vpop.xlane.xlu0 %305
    %v307 = vsel %vm291, %v303, 0.0
    %308 = vadd.xlane.f32.xlu0 %v307
    %v309 = vpop.xlane.xlu0 %308
    %v310 = vrcp.pop %v306
    %v311 = vrcp.pop %v309
    %v312 = vmul.f32 %v301, %v310
    %v313 = vmul.f32 %v303, %v311
    %vm314 = vcmask 64512
    %v316 = vsel %vm314, %v312, 0
    %318 = vmatprep.subr.mxu0 0.0
    %319 = vmatpush1.msra.mxu0 %v60
    %320 = vmatprep.subr.mxu0 0.0
    %321 = vmatpush1.msra.mxu0 0.0
    %322 = vmatprep.subr.mxu0 0.0
    %323 = vmatpush1.msra.mxu0 0.0
    %324 = vmatprep.subr.mxu0 0.0
    %325 = vmatpush1.msra.mxu0 0.0
    %326 = vmatprep.subr.mxu0 0.0
    %327 = vmatpush1.msra.mxu0 0.0
    %328 = vmatprep.subr.mxu0 0.0
    %329 = vmatpush1.msra.mxu0 0.0
    %330 = vmatprep.subr.mxu0 0.0
    %331 = vmatpush1.msra.mxu0 0.0
    %332 = vmatprep.subr.mxu0 0.0
    %333 = vmatpush1.msra.mxu0 0.0
    %334 = vmatprep.subr.mxu0 0.0
    %335 = vmatpush1.msra.mxu0 0.0
    %336 = vmatprep.subr.mxu0 0.0
    %337 = vmatpush1.msra.mxu0 0.0
    %338 = vmatprep.subr.mxu0 0.0
    %339 = vmatpush1.msra.mxu0 0.0
    %340 = vmatprep.subr.mxu0 0.0
    %341 = vmatpush1.msra.mxu0 0.0
    %342 = vmatprep.subr.mxu0 0.0
    %343 = vmatpush1.msra.mxu0 0.0
    %344 = vmatprep.subr.mxu0 0.0
    %345 = vmatpush1.msra.mxu0 0.0
    %346 = vmatprep.subr.mxu0 0.0
    %347 = vmatpush1.msra.mxu0 0.0
    %348 = vmatprep.subr.mxu0 0.0
    %349 = vmatpush1.msra.mxu0 0.0
    %350 = vmatprep.subr.mxu0 0.0
    %351 = vmatpush1.msra.mxu0 0.0
    %352 = vmatprep.subr.mxu0 0.0
    %353 = vmatpush1.msra.mxu0 0.0
    %354 = vmatprep.subr.mxu0 0.0
    %355 = vmatpush1.msra.mxu0 0.0
    %356 = vmatprep.subr.mxu0 0.0
    %357 = vmatpush1.msra.mxu0 0.0
    %358 = vmatprep.subr.mxu0 0.0
    %359 = vmatpush1.msra.mxu0 0.0
    %360 = vmatprep.subr.mxu0 0.0
    %361 = vmatpush1.msra.mxu0 0.0
    %362 = vmatprep.subr.mxu0 0.0
    %363 = vmatpush1.msra.mxu0 0.0
    %364 = vmatprep.subr.mxu0 0.0
    %365 = vmatpush1.msra.mxu0 0.0
    %366 = vmatprep.subr.mxu0 0.0
    %367 = vmatpush1.msra.mxu0 0.0
    %368 = vmatprep.subr.mxu0 0.0
    %369 = vmatpush1.msra.mxu0 0.0
    %370 = vmatprep.subr.mxu0 0.0
    %371 = vmatpush1.msra.mxu0 0.0
    %372 = vmatprep.subr.mxu0 0.0
    %373 = vmatpush1.msra.mxu0 0.0
    %374 = vmatprep.subr.mxu0 0.0
    %375 = vmatpush1.msra.mxu0 0.0
    %376 = vmatprep.subr.mxu0 0.0
    %377 = vmatpush1.msra.mxu0 0.0
    %378 = vmatprep.subr.mxu0 0.0
    %379 = vmatpush1.msra.mxu0 0.0
    %380 = vmatprep.subr.mxu0 0.0
    %381 = vmatpush1.msra.mxu0 0.0
    %382 = vmatprep.mubr.f32.mxu0 0.0
    %383 = vmatmul.mubr.f32.gmra.mrb[0].mxu0 %v316
    %v384 = vpop.f32.mrb[0].mxu0
    %v385 = vadd.f32 0.0, %v384
    %v386 = vpop.f32.mrb[0].mxu0
    %387 = vdwg.mxu0
    %v389 = vsel %vm314, %v313, 0
    %391 = vmatprep.subr.mxu0 0.0
    %392 = vmatpush1.msra.mxu0 %v61
    %393 = vmatprep.subr.mxu0 0.0
    %394 = vmatpush1.msra.mxu0 0.0
    %395 = vmatprep.subr.mxu0 0.0
    %396 = vmatpush1.msra.mxu0 0.0
    %397 = vmatprep.subr.mxu0 0.0
    %398 = vmatpush1.msra.mxu0 0.0
    %399 = vmatprep.subr.mxu0 0.0
    %400 = vmatpush1.msra.mxu0 0.0
    %401 = vmatprep.subr.mxu0 0.0
    %402 = vmatpush1.msra.mxu0 0.0
    %403 = vmatprep.subr.mxu0 0.0
    %404 = vmatpush1.msra.mxu0 0.0
    %405 = vmatprep.subr.mxu0 0.0
    %406 = vmatpush1.msra.mxu0 0.0
    %407 = vmatprep.subr.mxu0 0.0
    %408 = vmatpush1.msra.mxu0 0.0
    %409 = vmatprep.subr.mxu0 0.0
    %410 = vmatpush1.msra.mxu0 0.0
    %411 = vmatprep.subr.mxu0 0.0
    %412 = vmatpush1.msra.mxu0 0.0
    %413 = vmatprep.subr.mxu0 0.0
    %414 = vmatpush1.msra.mxu0 0.0
    %415 = vmatprep.subr.mxu0 0.0
    %416 = vmatpush1.msra.mxu0 0.0
    %417 = vmatprep.subr.mxu0 0.0
    %418 = vmatpush1.msra.mxu0 0.0
    %419 = vmatprep.subr.mxu0 0.0
    %420 = vmatpush1.msra.mxu0 0.0
    %421 = vmatprep.subr.mxu0 0.0
    %422 = vmatpush1.msra.mxu0 0.0
    %423 = vmatprep.subr.mxu0 0.0
    %424 = vmatpush1.msra.mxu0 0.0
    %425 = vmatprep.subr.mxu0 0.0
    %426 = vmatpush1.msra.mxu0 0.0
    %427 = vmatprep.subr.mxu0 0.0
    %428 = vmatpush1.msra.mxu0 0.0
    %429 = vmatprep.subr.mxu0 0.0
    %430 = vmatpush1.msra.mxu0 0.0
    %431 = vmatprep.subr.mxu0 0.0
    %432 = vmatpush1.msra.mxu0 0.0
    %433 = vmatprep.subr.mxu0 0.0
    %434 = vmatpush1.msra.mxu0 0.0
    %435 = vmatprep.subr.mxu0 0.0
    %436 = vmatpush1.msra.mxu0 0.0
    %437 = vmatprep.subr.mxu0 0.0
    %438 = vmatpush1.msra.mxu0 0.0
    %439 = vmatprep.subr.mxu0 0.0
    %440 = vmatpush1.msra.mxu0 0.0
    %441 = vmatprep.subr.mxu0 0.0
    %442 = vmatpush1.msra.mxu0 0.0
    %443 = vmatprep.subr.mxu0 0.0
    %444 = vmatpush1.msra.mxu0 0.0
    %445 = vmatprep.subr.mxu0 0.0
    %446 = vmatpush1.msra.mxu0 0.0
    %447 = vmatprep.subr.mxu0 0.0
    %448 = vmatpush1.msra.mxu0 0.0
    %449 = vmatprep.subr.mxu0 0.0
    %450 = vmatpush1.msra.mxu0 0.0
    %451 = vmatprep.subr.mxu0 0.0
    %452 = vmatpush1.msra.mxu0 0.0
    %453 = vmatprep.subr.mxu0 0.0
    %454 = vmatpush1.msra.mxu0 0.0
    %455 = vmatprep.mubr.f32.mxu0 0.0
    %456 = vmatmul.mubr.f32.gmra.mrb[0].mxu0 %v389
    %v457 = vpop.f32.mrb[0].mxu0
    %v458 = vadd.f32 0.0, %v457
    %v459 = vpop.f32.mrb[0].mxu0
    %460 = vdwg.mxu0
    %vm461 = vcmask 257024
    %v462 = vsel %vm461, %v385, 0.0
    %463 = vadd.xlane.f32.xlu0 %v462
    %v464 = vpop.xlane.xlu0 %463
    %v465 = vsel %vm461, %v458, 0.0
    %466 = vadd.xlane.f32.xlu0 %v465
    %v467 = vpop.xlane.xlu0 %466
    %v468 = vrcp.pop 32.0
    %v469 = vmul.f32 %v464, %v468
    %v470 = vmul.f32 %v467, %v468
    %v471 = vsub.f32 %v385, %v469
    %v472 = vsub.f32 %v458, %v470
    %v473 = vmul.f32 %v471, %v471
    %v474 = vmul.f32 %v472, %v472
    %v475 = vsel %vm461, %v473, 0.0
    %476 = vadd.xlane.f32.xlu0 %v475
    %v477 = vpop.xlane.xlu0 %476
    %v478 = vsel %vm461, %v474, 0.0
    %479 = vadd.xlane.f32.xlu0 %v478
    %v480 = vpop.xlane.xlu0 %479
    %v481 = vmul.f32 %v477, %v468
    %v482 = vmul.f32 %v480, %v468
    %v483 = vadd.f32 %v481, 1e-05
    %v484 = vadd.f32 %v482, 1e-05
    %v485 = vrsqrt.pop %v483
    %v486 = vrsqrt.pop %v484
    %v487 = vmul.f32 %v471, %v485
    %v488 = vmul.f32 %v472, %v486
    %v490 = vlaneseq
    %v491 = vshrl.u32 %v490, 7
    %v492 = vsub.s32 0, %v491
    %v493 = vrot.slane %v62, %v492
    %v495 = vmul.f32 %v487, %v493
    %v496 = vmul.f32 %v488, %v493
    %v498 = vlaneseq
    %v499 = vshrl.u32 %v498, 7
    %v500 = vsub.s32 0, %v499
    %v501 = vrot.slane %v63, %v500
    %v503 = vadd.f32 %v495, %v501
    %v504 = vadd.f32 %v496, %v501
    %505 = vst.msk [vmem:[#allocation8] sm:$0xf] %vm461, %v503
    %506 = vst.msk [vmem:[#allocation8 + $0x4] sm:$0xf] %vm461, %v504
    // Predicated region
    $region34: #{tpu_custom_call.1} parent=1 // pred_check
      _
    $region35: #{tpu_custom_call.1} parent=1 // pred_check_branch
      %508 = sbr.rel (0) target = $region37
    $region36: #{tpu_custom_call.1} parent=1 // pred_region
      %s510 = ssub.s32 128, 128
      %511 = vsyncadd [#allocation4], %s510
      %s512 = sshll.u32 [#allocation8], 4
      %s513 = int_to_ptr.vmem [resolvable:$true] %s512
      %518 = dma.vmem_to_hbm [thread:$0]  %s513, 128, %s5, [#allocation4], 64, 64, 4
    $region37: #{tpu_custom_call.1} parent=1 // pred_fallthru
      _
    // Predicated region
    $region38: #{tpu_custom_call.1} parent=1 // pred_check
      _
    $region39: #{tpu_custom_call.1} parent=1 // pred_check_branch
      %520 = sbr.rel (0) target = $region41
    $region40: #{tpu_custom_call.1} parent=1 // pred_region
      %521 = dma.done [#allocation4], 128
    $region41: #{tpu_custom_call.1} parent=1 // pred_fallthru
      _
    %522 = vsyncpa [#allocation3], 1
    %523 = vsyncpa [#allocation6], 1
    %524 = vsyncpa [#allocation4], 1

</llo_original>
